<compile_context>
chip_gen: v5e
topology: v5e:2x2
jax: 0.10.0
libtpu: 0.0.40
codegen_flags: <defaults>
</compile_context>

<pallas_src>
import functools

import jax
import jax.numpy as jnp
from jax import lax
from jax.experimental import pallas as pl
from jax.experimental.pallas import tpu as pltpu


def _ts_lstm_kernel(x_ref, w_ih_ref, b_ref, w_hh_ref, fc_w_ref, fc_b_ref,
                    out_ref, hs_scr, *, T, B):
    """Fused TsLSTMNet forward: input projection + LSTM recurrence + fc.

    x_ref    : (T*B, D)  flattened inputs (seq-major)
    w_ih_ref : (D, 4H)   input weights (transposed)
    b_ref    : (1, 4H)   b_ih + b_hh
    w_hh_ref : (H, 4H)   recurrent weights (transposed)
    fc_w_ref : (H, 1)    fc weight (transposed)
    fc_b_ref : (1, 1)    fc bias
    out_ref  : (T*B, 1)  output
    hs_scr   : (T*B, H)  VMEM scratch holding all hidden states
    """
    H = w_hh_ref.shape[0]
    G = 4 * H

    # Hoisted, batched input projection for ALL timesteps (independent of h):
    # one (T*B, D) @ (D, 4H) MXU matmul; result stays in vregs.
    gx = jnp.dot(x_ref[...], w_ih_ref[...],
                 preferred_element_type=jnp.float32) + b_ref[...]

    w_hh = w_hh_ref[...]                              # (H, 4H), live all steps

    # Hoisted activation plumbing (built once, reused by every step).
    # PyTorch gate order (i, f, g, o): lanes [2H, 3H) are the tanh gate.
    # sigmoid(x) = 0.5*tanh(0.5*x) + 0.5  -> a single EUP tanh pass over the
    # whole (B, 4H) vreg covers all four gates; per-lane scale/bias selects
    # between tanh (g) and sigmoid (i, f, o).
    lane = lax.broadcasted_iota(jnp.int32, (B, G), 1)
    is_g = (lane >= 2 * H) & (lane < 3 * H)
    scale = jnp.where(is_g, 1.0, 0.5).astype(jnp.float32)   # pre & post scale
    shift = jnp.where(is_g, 0.0, 0.5).astype(jnp.float32)   # post bias

    h = jnp.zeros((B, H), jnp.float32)
    c = jnp.zeros((B, H), jnp.float32)

    # T is tiny and static -> full unroll; no per-step grid/loop bookkeeping on
    # the serial critical path, W_hh / h / c stay in registers.
    for t in range(T):
        gates = gx[t * B:(t + 1) * B, :] + jnp.dot(
            h, w_hh, preferred_element_type=jnp.float32)      # (B, 4H)
        act = jnp.tanh(gates * scale) * scale + shift         # 1 EUP pass/step
        i_g = act[:, 0 * H:1 * H]
        f_g = act[:, 1 * H:2 * H]
        g_g = act[:, 2 * H:3 * H]
        o_g = act[:, 3 * H:4 * H]
        c = f_g * c + i_g * g_g
        h = o_g * jnp.tanh(c)
        hs_scr[t * B:(t + 1) * B, :] = h                      # VMEM scratch only

    # Final fc fused in-kernel: only the (T*B, 1) result ever touches HBM.
    out_ref[...] = (jnp.dot(hs_scr[...], fc_w_ref[...],
                            preferred_element_type=jnp.float32)
                    + fc_b_ref[...])


@jax.jit
def ts_lstm_net_forward(x, w_ih, w_hh, b_ih, b_hh, fc_w, fc_b):
    """Pallas forward of TsLSTMNet.

    x:     (T, B, D) float32   (seq-major, like PyTorch nn.LSTM default)
    w_ih:  (4H, D), w_hh: (4H, H), b_ih/b_hh: (4H,)   (PyTorch nn.LSTM layout)
    fc_w:  (1, H), fc_b: (1,)                          (PyTorch nn.Linear layout)
    returns: (T, B, 1) float32
    """
    T, B, D = x.shape
    H = w_hh.shape[1]
    f32 = jnp.float32

    x2 = x.astype(f32).reshape(T * B, D)
    w_ih_t = jnp.asarray(w_ih, f32).T                         # (D, 4H)
    w_hh_t = jnp.asarray(w_hh, f32).T                         # (H, 4H)
    b2 = (jnp.asarray(b_ih, f32) + jnp.asarray(b_hh, f32)).reshape(1, 4 * H)
    fc_w_t = jnp.asarray(fc_w, f32).T                         # (H, 1)
    fc_b2 = jnp.asarray(fc_b, f32).reshape(1, 1)

    kernel = functools.partial(_ts_lstm_kernel, T=T, B=B)

    out = pl.pallas_call(
        kernel,
        out_shape=jax.ShapeDtypeStruct((T * B, 1), f32),
        grid=(1,),                                            # single invocation
        in_specs=[
            pl.BlockSpec((T * B, D), lambda i: (0, 0)),       # x (whole)
            pl.BlockSpec((D, 4 * H), lambda i: (0, 0)),       # W_ih^T
            pl.BlockSpec((1, 4 * H), lambda i: (0, 0)),       # bias
            pl.BlockSpec((H, 4 * H), lambda i: (0, 0)),       # W_hh^T
            pl.BlockSpec((H, 1), lambda i: (0, 0)),           # fc_w^T
            pl.BlockSpec((1, 1), lambda i: (0, 0)),           # fc_b
        ],
        out_specs=pl.BlockSpec((T * B, 1), lambda i: (0, 0)),
        scratch_shapes=[pltpu.VMEM((T * B, H), f32)],          # hidden states
        compiler_params=pltpu.CompilerParams(
            dimension_semantics=("arbitrary",)),
    )(x2, w_ih_t, b2, w_hh_t, fc_w_t, fc_b2)

    return out.reshape(T, B, 1)


def ts_lstm_net_reference(x, w_ih, w_hh, b_ih, b_hh, fc_w, fc_b):
    """Pure-JAX reference (same semantics as torch nn.LSTM + nn.Linear)."""
    T, B, D = x.shape
    H = w_hh.shape[1]
    b = b_ih + b_hh

    def step(carry, x_t):
        h, c = carry
        gates = x_t @ w_ih.T + h @ w_hh.T + b
        i = jax.nn.sigmoid(gates[:, 0 * H:1 * H])
        f = jax.nn.sigmoid(gates[:, 1 * H:2 * H])
        g = jnp.tanh(gates[:, 2 * H:3 * H])
        o = jax.nn.sigmoid(gates[:, 3 * H:4 * H])
        c = f * c + i * g
        h = o * jnp.tanh(c)
        return (h, c), h

    init = (jnp.zeros((B, H), jnp.float32), jnp.zeros((B, H), jnp.float32))
    _, hs = lax.scan(step, init, x)                    # (T, B, H)
    return hs @ fc_w.T + fc_b                          # (T, B, 1)


if __name__ == "__main__":
    # Small shapes implied by the module: seq=8, batch=2, input=16, hidden=32.
    T, B, D, H = 8, 2, 16, 32

    key = jax.random.PRNGKey(0)
    ks = jax.random.split(key, 8)
    s = 1.0 / float(jnp.sqrt(H))
    x = jax.random.normal(ks[0], (T, B, D), jnp.float32)
    w_ih = jax.random.uniform(ks[1], (4 * H, D), jnp.float32, -s, s)
    w_hh = jax.random.uniform(ks[2], (4 * H, H), jnp.float32, -s, s)
    b_ih = jax.random.uniform(ks[3], (4 * H,), jnp.float32, -s, s)
    b_hh = jax.random.uniform(ks[4], (4 * H,), jnp.float32, -s, s)
    fc_w = jax.random.uniform(ks[5], (1, H), jnp.float32, -s, s)
    fc_b = jax.random.uniform(ks[6], (1,), jnp.float32, -s, s)

    out = ts_lstm_net_forward(x, w_ih, w_hh, b_ih, b_hh, fc_w, fc_b)
    out = jax.block_until_ready(out)

    ref = ts_lstm_net_reference(x, w_ih, w_hh, b_ih, b_hh, fc_w, fc_b)
    assert out.shape == (T, B, 1), out.shape
    # Tolerance slightly looser than bit-level because the kernel lowers
    # sigmoid via the tanh identity (mathematically equal, few-ulp difference
    # accumulated over the 8-step recurrence).
    max_err = float(jnp.max(jnp.abs(out - ref)))
    assert jnp.allclose(out, ref, atol=1e-4, rtol=1e-4), max_err

    print("KERNEL_OK")
</pallas_src>

<mosaic_0001>
module attributes {stable_mosaic.version = 11 : i64} {
  func.func @_ts_lstm_kernel(%arg0: i32, %arg1: memref<16x16xf32, #tpu.memory_space<vmem>>, %arg2: memref<16x128xf32, #tpu.memory_space<vmem>>, %arg3: memref<1x128xf32, #tpu.memory_space<vmem>>, %arg4: memref<32x128xf32, #tpu.memory_space<vmem>>, %arg5: memref<32x1xf32, #tpu.memory_space<vmem>>, %arg6: memref<1x1xf32, #tpu.memory_space<vmem>>, %arg7: memref<16x1xf32, #tpu.memory_space<vmem>>, %arg8: memref<16x32xf32, #tpu.memory_space<vmem>>) attributes {dimension_semantics = [#tpu.dimension_semantics<arbitrary>], iteration_bounds = array<i64: 1>, scalar_prefetch = 0 : i64, scratch_operands = 1 : i64, tpu.core_type = #tpu.core_type<tc>, window_params = [{pipeline_mode = #tpu.pipeline_mode<synchronous>, transform_indices = @transform_0, window_bounds = array<i64: 16, 16>}, {pipeline_mode = #tpu.pipeline_mode<synchronous>, transform_indices = @transform_1, window_bounds = array<i64: 16, 128>}, {pipeline_mode = #tpu.pipeline_mode<synchronous>, transform_indices = @transform_2, window_bounds = array<i64: 1, 128>}, {pipeline_mode = #tpu.pipeline_mode<synchronous>, transform_indices = @transform_3, window_bounds = array<i64: 32, 128>}, {pipeline_mode = #tpu.pipeline_mode<synchronous>, transform_indices = @transform_4, window_bounds = array<i64: 32, 1>}, {pipeline_mode = #tpu.pipeline_mode<synchronous>, transform_indices = @transform_5, window_bounds = array<i64: 1, 1>}, {pipeline_mode = #tpu.pipeline_mode<synchronous>, transform_indices = @transform_6, window_bounds = array<i64: 16, 1>}]} {
    %c0 = arith.constant 0 : index
    %c0_0 = arith.constant 0 : index
    %0 = vector.load %arg1[%c0, %c0_0] : memref<16x16xf32, #tpu.memory_space<vmem>>, vector<16x16xf32>
    %c0_1 = arith.constant 0 : index
    %c0_2 = arith.constant 0 : index
    %1 = vector.load %arg2[%c0_1, %c0_2] : memref<16x128xf32, #tpu.memory_space<vmem>>, vector<16x128xf32>
    %cst = arith.constant dense<0.000000e+00> : vector<16x128xf32>
    %2 = tpu.matmul %0, %1, %cst {dimension_numbers = #tpu.dot_dimension_numbers<[1], [0], [0], [1], [0, 0, 1, 1], [], []>} : vector<16x16xf32>, vector<16x128xf32>, vector<16x128xf32> -> vector<16x128xf32>
    %c0_3 = arith.constant 0 : index
    %c0_4 = arith.constant 0 : index
    %3 = vector.load %arg3[%c0_3, %c0_4] : memref<1x128xf32, #tpu.memory_space<vmem>>, vector<1x128xf32>
    %4 = vector.broadcast %3 : vector<1x128xf32> to vector<16x128xf32>
    %5 = arith.addf %2, %4 : vector<16x128xf32>
    %c0_5 = arith.constant 0 : index
    %c0_6 = arith.constant 0 : index
    %6 = vector.load %arg4[%c0_5, %c0_6] : memref<32x128xf32, #tpu.memory_space<vmem>>, vector<32x128xf32>
    %7 = tpu.iota {dimensions = array<i32: 1>} : vector<2x128xi32>
    %c64_i32 = arith.constant 64 : i32
    %8 = vector.broadcast %c64_i32 : i32 to vector<2x128xi32>
    %9 = arith.cmpi sge, %7, %8 : vector<2x128xi32>
    %c96_i32 = arith.constant 96 : i32
    %10 = vector.broadcast %c96_i32 : i32 to vector<2x128xi32>
    %11 = arith.cmpi slt, %7, %10 : vector<2x128xi32>
    %12 = arith.andi %9, %11 : vector<2x128xi1>
    %cst_7 = arith.constant 1.000000e+00 : f32
    %cst_8 = arith.constant 5.000000e-01 : f32
    %13 = vector.broadcast %cst_7 : f32 to vector<2x128xf32>
    %14 = vector.broadcast %cst_8 : f32 to vector<2x128xf32>
    %15 = arith.select %12, %13, %14 : vector<2x128xi1>, vector<2x128xf32>
    %cst_9 = arith.constant 0.000000e+00 : f32
    %cst_10 = arith.constant 5.000000e-01 : f32
    %16 = vector.broadcast %cst_9 : f32 to vector<2x128xf32>
    %17 = vector.broadcast %cst_10 : f32 to vector<2x128xf32>
    %18 = arith.select %12, %16, %17 : vector<2x128xi1>, vector<2x128xf32>
    %cst_11 = arith.constant 0.000000e+00 : f32
    %19 = vector.broadcast %cst_11 : f32 to vector<2x32xf32>
    %cst_12 = arith.constant 0.000000e+00 : f32
    %20 = vector.broadcast %cst_12 : f32 to vector<2x32xf32>
    %21 = vector.extract_strided_slice %5 {offsets = [0, 0], sizes = [2, 128], strides = [1, 1]} : vector<16x128xf32> to vector<2x128xf32>
    %cst_13 = arith.constant dense<0.000000e+00> : vector<2x128xf32>
    %22 = tpu.matmul %19, %6, %cst_13 {dimension_numbers = #tpu.dot_dimension_numbers<[1], [0], [0], [1], [0, 0, 1, 1], [], []>} : vector<2x32xf32>, vector<32x128xf32>, vector<2x128xf32> -> vector<2x128xf32>
    %23 = arith.addf %21, %22 : vector<2x128xf32>
    %24 = arith.mulf %23, %15 : vector<2x128xf32>
    %25 = math.tanh %24 : vector<2x128xf32>
    %26 = arith.mulf %25, %15 : vector<2x128xf32>
    %27 = arith.addf %26, %18 : vector<2x128xf32>
    %28 = vector.extract_strided_slice %27 {offsets = [0, 0], sizes = [2, 32], strides = [1, 1]} : vector<2x128xf32> to vector<2x32xf32>
    %29 = vector.extract_strided_slice %27 {offsets = [0, 32], sizes = [2, 32], strides = [1, 1]} : vector<2x128xf32> to vector<2x32xf32>
    %30 = vector.extract_strided_slice %27 {offsets = [0, 64], sizes = [2, 32], strides = [1, 1]} : vector<2x128xf32> to vector<2x32xf32>
    %31 = vector.extract_strided_slice %27 {offsets = [0, 96], sizes = [2, 32], strides = [1, 1]} : vector<2x128xf32> to vector<2x32xf32>
    %32 = arith.mulf %29, %20 : vector<2x32xf32>
    %33 = arith.mulf %28, %30 : vector<2x32xf32>
    %34 = arith.addf %32, %33 : vector<2x32xf32>
    %35 = math.tanh %34 : vector<2x32xf32>
    %36 = arith.mulf %31, %35 : vector<2x32xf32>
    %c0_14 = arith.constant 0 : index
    %c0_15 = arith.constant 0 : index
    %37 = vector.load %arg8[%c0_14, %c0_15] : memref<16x32xf32, #tpu.memory_space<vmem>>, vector<2x32xf32>
    tpu.vector_store %arg8[%c0_14, %c0_15], %36 {strides = array<i32>} : memref<16x32xf32, #tpu.memory_space<vmem>>, vector<2x32xf32>,
    %38 = vector.extract_strided_slice %5 {offsets = [2, 0], sizes = [2, 128], strides = [1, 1]} : vector<16x128xf32> to vector<2x128xf32>
    %cst_16 = arith.constant dense<0.000000e+00> : vector<2x128xf32>
    %39 = tpu.matmul %36, %6, %cst_16 {dimension_numbers = #tpu.dot_dimension_numbers<[1], [0], [0], [1], [0, 0, 1, 1], [], []>} : vector<2x32xf32>, vector<32x128xf32>, vector<2x128xf32> -> vector<2x128xf32>
    %40 = arith.addf %38, %39 : vector<2x128xf32>
    %41 = arith.mulf %40, %15 : vector<2x128xf32>
    %42 = math.tanh %41 : vector<2x128xf32>
    %43 = arith.mulf %42, %15 : vector<2x128xf32>
    %44 = arith.addf %43, %18 : vector<2x128xf32>
    %45 = vector.extract_strided_slice %44 {offsets = [0, 0], sizes = [2, 32], strides = [1, 1]} : vector<2x128xf32> to vector<2x32xf32>
    %46 = vector.extract_strided_slice %44 {offsets = [0, 32], sizes = [2, 32], strides = [1, 1]} : vector<2x128xf32> to vector<2x32xf32>
    %47 = vector.extract_strided_slice %44 {offsets = [0, 64], sizes = [2, 32], strides = [1, 1]} : vector<2x128xf32> to vector<2x32xf32>
    %48 = vector.extract_strided_slice %44 {offsets = [0, 96], sizes = [2, 32], strides = [1, 1]} : vector<2x128xf32> to vector<2x32xf32>
    %49 = arith.mulf %46, %34 : vector<2x32xf32>
    %50 = arith.mulf %45, %47 : vector<2x32xf32>
    %51 = arith.addf %49, %50 : vector<2x32xf32>
    %52 = math.tanh %51 : vector<2x32xf32>
    %53 = arith.mulf %48, %52 : vector<2x32xf32>
    %c2 = arith.constant 2 : index
    %c0_17 = arith.constant 0 : index
    %54 = vector.load %arg8[%c2, %c0_17] : memref<16x32xf32, #tpu.memory_space<vmem>>, vector<2x32xf32>
    tpu.vector_store %arg8[%c2, %c0_17], %53 {strides = array<i32>} : memref<16x32xf32, #tpu.memory_space<vmem>>, vector<2x32xf32>,
    %55 = vector.extract_strided_slice %5 {offsets = [4, 0], sizes = [2, 128], strides = [1, 1]} : vector<16x128xf32> to vector<2x128xf32>
    %cst_18 = arith.constant dense<0.000000e+00> : vector<2x128xf32>
    %56 = tpu.matmul %53, %6, %cst_18 {dimension_numbers = #tpu.dot_dimension_numbers<[1], [0], [0], [1], [0, 0, 1, 1], [], []>} : vector<2x32xf32>, vector<32x128xf32>, vector<2x128xf32> -> vector<2x128xf32>
    %57 = arith.addf %55, %56 : vector<2x128xf32>
    %58 = arith.mulf %57, %15 : vector<2x128xf32>
    %59 = math.tanh %58 : vector<2x128xf32>
    %60 = arith.mulf %59, %15 : vector<2x128xf32>
    %61 = arith.addf %60, %18 : vector<2x128xf32>
    %62 = vector.extract_strided_slice %61 {offsets = [0, 0], sizes = [2, 32], strides = [1, 1]} : vector<2x128xf32> to vector<2x32xf32>
    %63 = vector.extract_strided_slice %61 {offsets = [0, 32], sizes = [2, 32], strides = [1, 1]} : vector<2x128xf32> to vector<2x32xf32>
    %64 = vector.extract_strided_slice %61 {offsets = [0, 64], sizes = [2, 32], strides = [1, 1]} : vector<2x128xf32> to vector<2x32xf32>
    %65 = vector.extract_strided_slice %61 {offsets = [0, 96], sizes = [2, 32], strides = [1, 1]} : vector<2x128xf32> to vector<2x32xf32>
    %66 = arith.mulf %63, %51 : vector<2x32xf32>
    %67 = arith.mulf %62, %64 : vector<2x32xf32>
    %68 = arith.addf %66, %67 : vector<2x32xf32>
    %69 = math.tanh %68 : vector<2x32xf32>
    %70 = arith.mulf %65, %69 : vector<2x32xf32>
    %c4 = arith.constant 4 : index
    %c0_19 = arith.constant 0 : index
    %71 = vector.load %arg8[%c4, %c0_19] : memref<16x32xf32, #tpu.memory_space<vmem>>, vector<2x32xf32>
    tpu.vector_store %arg8[%c4, %c0_19], %70 {strides = array<i32>} : memref<16x32xf32, #tpu.memory_space<vmem>>, vector<2x32xf32>,
    %72 = vector.extract_strided_slice %5 {offsets = [6, 0], sizes = [2, 128], strides = [1, 1]} : vector<16x128xf32> to vector<2x128xf32>
    %cst_20 = arith.constant dense<0.000000e+00> : vector<2x128xf32>
    %73 = tpu.matmul %70, %6, %cst_20 {dimension_numbers = #tpu.dot_dimension_numbers<[1], [0], [0], [1], [0, 0, 1, 1], [], []>} : vector<2x32xf32>, vector<32x128xf32>, vector<2x128xf32> -> vector<2x128xf32>
    %74 = arith.addf %72, %73 : vector<2x128xf32>
    %75 = arith.mulf %74, %15 : vector<2x128xf32>
    %76 = math.tanh %75 : vector<2x128xf32>
    %77 = arith.mulf %76, %15 : vector<2x128xf32>
    %78 = arith.addf %77, %18 : vector<2x128xf32>
    %79 = vector.extract_strided_slice %78 {offsets = [0, 0], sizes = [2, 32], strides = [1, 1]} : vector<2x128xf32> to vector<2x32xf32>
    %80 = vector.extract_strided_slice %78 {offsets = [0, 32], sizes = [2, 32], strides = [1, 1]} : vector<2x128xf32> to vector<2x32xf32>
    %81 = vector.extract_strided_slice %78 {offsets = [0, 64], sizes = [2, 32], strides = [1, 1]} : vector<2x128xf32> to vector<2x32xf32>
    %82 = vector.extract_strided_slice %78 {offsets = [0, 96], sizes = [2, 32], strides = [1, 1]} : vector<2x128xf32> to vector<2x32xf32>
    %83 = arith.mulf %80, %68 : vector<2x32xf32>
    %84 = arith.mulf %79, %81 : vector<2x32xf32>
    %85 = arith.addf %83, %84 : vector<2x32xf32>
    %86 = math.tanh %85 : vector<2x32xf32>
    %87 = arith.mulf %82, %86 : vector<2x32xf32>
    %c6 = arith.constant 6 : index
    %c0_21 = arith.constant 0 : index
    %88 = vector.load %arg8[%c6, %c0_21] : memref<16x32xf32, #tpu.memory_space<vmem>>, vector<2x32xf32>
    tpu.vector_store %arg8[%c6, %c0_21], %87 {strides = array<i32>} : memref<16x32xf32, #tpu.memory_space<vmem>>, vector<2x32xf32>,
    %89 = vector.extract_strided_slice %5 {offsets = [8, 0], sizes = [2, 128], strides = [1, 1]} : vector<16x128xf32> to vector<2x128xf32>
    %cst_22 = arith.constant dense<0.000000e+00> : vector<2x128xf32>
    %90 = tpu.matmul %87, %6, %cst_22 {dimension_numbers = #tpu.dot_dimension_numbers<[1], [0], [0], [1], [0, 0, 1, 1], [], []>} : vector<2x32xf32>, vector<32x128xf32>, vector<2x128xf32> -> vector<2x128xf32>
    %91 = arith.addf %89, %90 : vector<2x128xf32>
    %92 = arith.mulf %91, %15 : vector<2x128xf32>
    %93 = math.tanh %92 : vector<2x128xf32>
    %94 = arith.mulf %93, %15 : vector<2x128xf32>
    %95 = arith.addf %94, %18 : vector<2x128xf32>
    %96 = vector.extract_strided_slice %95 {offsets = [0, 0], sizes = [2, 32], strides = [1, 1]} : vector<2x128xf32> to vector<2x32xf32>
    %97 = vector.extract_strided_slice %95 {offsets = [0, 32], sizes = [2, 32], strides = [1, 1]} : vector<2x128xf32> to vector<2x32xf32>
    %98 = vector.extract_strided_slice %95 {offsets = [0, 64], sizes = [2, 32], strides = [1, 1]} : vector<2x128xf32> to vector<2x32xf32>
    %99 = vector.extract_strided_slice %95 {offsets = [0, 96], sizes = [2, 32], strides = [1, 1]} : vector<2x128xf32> to vector<2x32xf32>
    %100 = arith.mulf %97, %85 : vector<2x32xf32>
    %101 = arith.mulf %96, %98 : vector<2x32xf32>
    %102 = arith.addf %100, %101 : vector<2x32xf32>
    %103 = math.tanh %102 : vector<2x32xf32>
    %104 = arith.mulf %99, %103 : vector<2x32xf32>
    %c8 = arith.constant 8 : index
    %c0_23 = arith.constant 0 : index
    %105 = vector.load %arg8[%c8, %c0_23] : memref<16x32xf32, #tpu.memory_space<vmem>>, vector<2x32xf32>
    tpu.vector_store %arg8[%c8, %c0_23], %104 {strides = array<i32>} : memref<16x32xf32, #tpu.memory_space<vmem>>, vector<2x32xf32>,
    %106 = vector.extract_strided_slice %5 {offsets = [10, 0], sizes = [2, 128], strides = [1, 1]} : vector<16x128xf32> to vector<2x128xf32>
    %cst_24 = arith.constant dense<0.000000e+00> : vector<2x128xf32>
    %107 = tpu.matmul %104, %6, %cst_24 {dimension_numbers = #tpu.dot_dimension_numbers<[1], [0], [0], [1], [0, 0, 1, 1], [], []>} : vector<2x32xf32>, vector<32x128xf32>, vector<2x128xf32> -> vector<2x128xf32>
    %108 = arith.addf %106, %107 : vector<2x128xf32>
    %109 = arith.mulf %108, %15 : vector<2x128xf32>
    %110 = math.tanh %109 : vector<2x128xf32>
    %111 = arith.mulf %110, %15 : vector<2x128xf32>
    %112 = arith.addf %111, %18 : vector<2x128xf32>
    %113 = vector.extract_strided_slice %112 {offsets = [0, 0], sizes = [2, 32], strides = [1, 1]} : vector<2x128xf32> to vector<2x32xf32>
    %114 = vector.extract_strided_slice %112 {offsets = [0, 32], sizes = [2, 32], strides = [1, 1]} : vector<2x128xf32> to vector<2x32xf32>
    %115 = vector.extract_strided_slice %112 {offsets = [0, 64], sizes = [2, 32], strides = [1, 1]} : vector<2x128xf32> to vector<2x32xf32>
    %116 = vector.extract_strided_slice %112 {offsets = [0, 96], sizes = [2, 32], strides = [1, 1]} : vector<2x128xf32> to vector<2x32xf32>
    %117 = arith.mulf %114, %102 : vector<2x32xf32>
    %118 = arith.mulf %113, %115 : vector<2x32xf32>
    %119 = arith.addf %117, %118 : vector<2x32xf32>
    %120 = math.tanh %119 : vector<2x32xf32>
    %121 = arith.mulf %116, %120 : vector<2x32xf32>
    %c10 = arith.constant 10 : index
    %c0_25 = arith.constant 0 : index
    %122 = vector.load %arg8[%c10, %c0_25] : memref<16x32xf32, #tpu.memory_space<vmem>>, vector<2x32xf32>
    tpu.vector_store %arg8[%c10, %c0_25], %121 {strides = array<i32>} : memref<16x32xf32, #tpu.memory_space<vmem>>, vector<2x32xf32>,
    %123 = vector.extract_strided_slice %5 {offsets = [12, 0], sizes = [2, 128], strides = [1, 1]} : vector<16x128xf32> to vector<2x128xf32>
    %cst_26 = arith.constant dense<0.000000e+00> : vector<2x128xf32>
    %124 = tpu.matmul %121, %6, %cst_26 {dimension_numbers = #tpu.dot_dimension_numbers<[1], [0], [0], [1], [0, 0, 1, 1], [], []>} : vector<2x32xf32>, vector<32x128xf32>, vector<2x128xf32> -> vector<2x128xf32>
    %125 = arith.addf %123, %124 : vector<2x128xf32>
    %126 = arith.mulf %125, %15 : vector<2x128xf32>
    %127 = math.tanh %126 : vector<2x128xf32>
    %128 = arith.mulf %127, %15 : vector<2x128xf32>
    %129 = arith.addf %128, %18 : vector<2x128xf32>
    %130 = vector.extract_strided_slice %129 {offsets = [0, 0], sizes = [2, 32], strides = [1, 1]} : vector<2x128xf32> to vector<2x32xf32>
    %131 = vector.extract_strided_slice %129 {offsets = [0, 32], sizes = [2, 32], strides = [1, 1]} : vector<2x128xf32> to vector<2x32xf32>
    %132 = vector.extract_strided_slice %129 {offsets = [0, 64], sizes = [2, 32], strides = [1, 1]} : vector<2x128xf32> to vector<2x32xf32>
    %133 = vector.extract_strided_slice %129 {offsets = [0, 96], sizes = [2, 32], strides = [1, 1]} : vector<2x128xf32> to vector<2x32xf32>
    %134 = arith.mulf %131, %119 : vector<2x32xf32>
    %135 = arith.mulf %130, %132 : vector<2x32xf32>
    %136 = arith.addf %134, %135 : vector<2x32xf32>
    %137 = math.tanh %136 : vector<2x32xf32>
    %138 = arith.mulf %133, %137 : vector<2x32xf32>
    %c12 = arith.constant 12 : index
    %c0_27 = arith.constant 0 : index
    %139 = vector.load %arg8[%c12, %c0_27] : memref<16x32xf32, #tpu.memory_space<vmem>>, vector<2x32xf32>
    tpu.vector_store %arg8[%c12, %c0_27], %138 {strides = array<i32>} : memref<16x32xf32, #tpu.memory_space<vmem>>, vector<2x32xf32>,
    %140 = vector.extract_strided_slice %5 {offsets = [14, 0], sizes = [2, 128], strides = [1, 1]} : vector<16x128xf32> to vector<2x128xf32>
    %cst_28 = arith.constant dense<0.000000e+00> : vector<2x128xf32>
    %141 = tpu.matmul %138, %6, %cst_28 {dimension_numbers = #tpu.dot_dimension_numbers<[1], [0], [0], [1], [0, 0, 1, 1], [], []>} : vector<2x32xf32>, vector<32x128xf32>, vector<2x128xf32> -> vector<2x128xf32>
    %142 = arith.addf %140, %141 : vector<2x128xf32>
    %143 = arith.mulf %142, %15 : vector<2x128xf32>
    %144 = math.tanh %143 : vector<2x128xf32>
    %145 = arith.mulf %144, %15 : vector<2x128xf32>
    %146 = arith.addf %145, %18 : vector<2x128xf32>
    %147 = vector.extract_strided_slice %146 {offsets = [0, 0], sizes = [2, 32], strides = [1, 1]} : vector<2x128xf32> to vector<2x32xf32>
    %148 = vector.extract_strided_slice %146 {offsets = [0, 32], sizes = [2, 32], strides = [1, 1]} : vector<2x128xf32> to vector<2x32xf32>
    %149 = vector.extract_strided_slice %146 {offsets = [0, 64], sizes = [2, 32], strides = [1, 1]} : vector<2x128xf32> to vector<2x32xf32>
    %150 = vector.extract_strided_slice %146 {offsets = [0, 96], sizes = [2, 32], strides = [1, 1]} : vector<2x128xf32> to vector<2x32xf32>
    %151 = arith.mulf %148, %136 : vector<2x32xf32>
    %152 = arith.mulf %147, %149 : vector<2x32xf32>
    %153 = arith.addf %151, %152 : vector<2x32xf32>
    %154 = math.tanh %153 : vector<2x32xf32>
    %155 = arith.mulf %150, %154 : vector<2x32xf32>
    %c14 = arith.constant 14 : index
    %c0_29 = arith.constant 0 : index
    %156 = vector.load %arg8[%c14, %c0_29] : memref<16x32xf32, #tpu.memory_space<vmem>>, vector<2x32xf32>
    tpu.vector_store %arg8[%c14, %c0_29], %155 {strides = array<i32>} : memref<16x32xf32, #tpu.memory_space<vmem>>, vector<2x32xf32>,
    %c0_30 = arith.constant 0 : index
    %c0_31 = arith.constant 0 : index
    %157 = vector.load %arg8[%c0_30, %c0_31] : memref<16x32xf32, #tpu.memory_space<vmem>>, vector<16x32xf32>
    %c0_32 = arith.constant 0 : index
    %c0_33 = arith.constant 0 : index
    %158 = vector.load %arg5[%c0_32, %c0_33] : memref<32x1xf32, #tpu.memory_space<vmem>>, vector<32x1xf32>
    %cst_34 = arith.constant dense<0.000000e+00> : vector<16x1xf32>
    %159 = tpu.matmul %157, %158, %cst_34 {dimension_numbers = #tpu.dot_dimension_numbers<[1], [0], [0], [1], [0, 0, 1, 1], [], []>} : vector<16x32xf32>, vector<32x1xf32>, vector<16x1xf32> -> vector<16x1xf32>
    %c0_35 = arith.constant 0 : index
    %c0_36 = arith.constant 0 : index
    %160 = vector.load %arg6[%c0_35, %c0_36] : memref<1x1xf32, #tpu.memory_space<vmem>>, vector<1x1xf32>
    %161 = vector.broadcast %160 : vector<1x1xf32> to vector<16x1xf32>
    %162 = arith.addf %159, %161 : vector<16x1xf32>
    %c0_37 = arith.constant 0 : index
    %c0_38 = arith.constant 0 : index
    %163 = vector.load %arg7[%c0_37, %c0_38] : memref<16x1xf32, #tpu.memory_space<vmem>>, vector<16x1xf32>
    tpu.vector_store %arg7[%c0_37, %c0_38], %162 {strides = array<i32>} : memref<16x1xf32, #tpu.memory_space<vmem>>, vector<16x1xf32>,
    return
  }
  func.func @transform_0(%arg0: i32) -> (i32, i32) {
    %c0_i32 = arith.constant 0 : i32
    %c0_i32_0 = arith.constant 0 : i32
    %c0_i32_1 = arith.constant 0 : i32
    return %c0_i32, %c0_i32_0 : i32, i32
  }
  func.func @transform_1(%arg0: i32) -> (i32, i32) {
    %c0_i32 = arith.constant 0 : i32
    %c0_i32_0 = arith.constant 0 : i32
    %c0_i32_1 = arith.constant 0 : i32
    return %c0_i32, %c0_i32_0 : i32, i32
  }
  func.func @transform_2(%arg0: i32) -> (i32, i32) {
    %c0_i32 = arith.constant 0 : i32
    %c0_i32_0 = arith.constant 0 : i32
    %c0_i32_1 = arith.constant 0 : i32
    return %c0_i32, %c0_i32_0 : i32, i32
  }
  func.func @transform_3(%arg0: i32) -> (i32, i32) {
    %c0_i32 = arith.constant 0 : i32
    %c0_i32_0 = arith.constant 0 : i32
    %c0_i32_1 = arith.constant 0 : i32
    return %c0_i32, %c0_i32_0 : i32, i32
  }
  func.func @transform_4(%arg0: i32) -> (i32, i32) {
    %c0_i32 = arith.constant 0 : i32
    %c0_i32_0 = arith.constant 0 : i32
    %c0_i32_1 = arith.constant 0 : i32
    return %c0_i32, %c0_i32_0 : i32, i32
  }
  func.func @transform_5(%arg0: i32) -> (i32, i32) {
    %c0_i32 = arith.constant 0 : i32
    %c0_i32_0 = arith.constant 0 : i32
    %c0_i32_1 = arith.constant 0 : i32
    return %c0_i32, %c0_i32_0 : i32, i32
  }
  func.func @transform_6(%arg0: i32) -> (i32, i32) {
    %c0_i32 = arith.constant 0 : i32
    %c0_i32_0 = arith.constant 0 : i32
    %c0_i32_1 = arith.constant 0 : i32
    return %c0_i32, %c0_i32_0 : i32, i32
  }
}

</mosaic_0001>

<llo_original>
// kernel: ts_lstm_net_forward.1
$region0: #{ts_lstm_net_forward.1}
  #allocation0 [shape = 'u32[]', space=smem, size = 0x4, offset = 0x4, fixed_abs, tag = 'smem constant byte address 0x4 - core index']
  #allocation1 [shape = 'u32[72,128]{1,0:T(1,128)}', space=vmem, size = 0x9000, scoped, tag = 'internal scratch']
  #allocation2 [shape = 'f32[16,32]{1,0:T(8,128)}', space=vmem, size = 0x2000, scoped, tag = 'scratch operand']
  #allocation3 [shape = 'f32[1,1]{1,0:T(1,128)S(1)}', space=vmem, size = 0x200, scoped, tag = 'scoped memory for ts_lstm_net_forward.1']
  %s0 = inlined_call_operand.hbm [shape: f32[16,16], index: 0, kind: input, shape index: {}]
  %s1 = inlined_call_operand.hbm [shape: f32[16,128], index: 1, kind: input, shape index: {}]
  %s2 = inlined_call_operand.vmem [shape: f32[1,128], index: 2, kind: input, shape index: {}]
  %s3 = inlined_call_operand.vmem [shape: f32[32,128], index: 3, kind: input, shape index: {}]
  %s4 = inlined_call_operand.vmem [shape: f32[32,1], index: 4, kind: input, shape index: {}]
  %s5 = inlined_call_operand.<no memory space> [shape: f32[1,1], index: 5, kind: input, shape index: {}]
  %s6 = inlined_call_operand.vmem [shape: f32[16,1], index: 6, kind: output, shape index: {}]
  %s7 = sld [smem:[#allocation0]]
  $region42: #{ts_lstm_net_forward.1} parent=0
    _
  %s9 = ssub.s32 1, %s7
  %s10 = scalar_select 0, %s9, %s7
  %v11 = vstv %s5
  %12 = vst [vmem:[#allocation3] sm:$0x1] %v11
  $region1: #{ts_lstm_net_forward.1} parent=0
    #allocation4 [shape = 'u8[8192]{0}', space=vmem, size = 0x2000, scoped, tag = 'input window, operand 0, single buffered']
    #allocation5 [shape = 's32[1]{0}', space=sflag, size = 0x4, scoped, tag = 'scoped memory for ts_lstm_net_forward.1']
    #allocation6 [shape = 'u8[8192]{0}', space=vmem, size = 0x2000, scoped, tag = 'input window, operand 1, single buffered']
    #allocation7 [shape = 's32[1]{0}', space=sflag, size = 0x4, scoped, tag = 'scoped memory for ts_lstm_net_forward.1']
    %13 = vsyncpa [#allocation5], 0
    %14 = vsyncpa [#allocation7], 0
    // Predicated region
    $region2: #{ts_lstm_net_forward.1} parent=1 // pred_check
      _
    $region3: #{ts_lstm_net_forward.1} parent=1 // pred_check_branch
      %16 = sbr.rel (0) target = $region5
    $region4: #{ts_lstm_net_forward.1} parent=1 // pred_region
      %18 = vsyncadd [#allocation5], 0
      %s19 = sshll.u32 %s0, 4
      %s20 = int_to_ptr.hbm [resolvable:$true] %s19
      %s21 = sshll.u32 [#allocation4], 4
      %s22 = int_to_ptr.vmem [resolvable:$true] %s21
      %27 = dma.hbm_to_vmem [thread:$0]  %s20, 256, %s22, [#allocation5], 128, 128, 8
    $region5: #{ts_lstm_net_forward.1} parent=1 // pred_fallthru
      _
    // Predicated region
    $region6: #{ts_lstm_net_forward.1} parent=1 // pred_check
      _
    $region7: #{ts_lstm_net_forward.1} parent=1 // pred_check_branch
      %29 = sbr.rel (0) target = $region9
    $region8: #{ts_lstm_net_forward.1} parent=1 // pred_region
      %31 = vsyncadd [#allocation7], 0
      %s32 = sshll.u32 %s1, 4
      %s33 = int_to_ptr.hbm [resolvable:$true] %s32
      %s34 = sshll.u32 [#allocation6], 4
      %s35 = int_to_ptr.vmem [resolvable:$true] %s34
      %40 = dma.hbm_to_vmem [thread:$0]  %s33, 256, %s35, [#allocation7], 128, 128, 8
    $region9: #{ts_lstm_net_forward.1} parent=1 // pred_fallthru
      _
    // Predicated region
    $region10: #{ts_lstm_net_forward.1} parent=1 // pred_check
      _
    $region11: #{ts_lstm_net_forward.1} parent=1 // pred_check_branch
      %42 = sbr.rel (0) target = $region13
    $region12: #{ts_lstm_net_forward.1} parent=1 // pred_region
      _
    $region13: #{ts_lstm_net_forward.1} parent=1 // pred_fallthru
      _
    // Predicated region
    $region14: #{ts_lstm_net_forward.1} parent=1 // pred_check
      _
    $region15: #{ts_lstm_net_forward.1} parent=1 // pred_check_branch
      %44 = sbr.rel (0) target = $region17
    $region16: #{ts_lstm_net_forward.1} parent=1 // pred_region
      _
    $region17: #{ts_lstm_net_forward.1} parent=1 // pred_fallthru
      _
    // Predicated region
    $region18: #{ts_lstm_net_forward.1} parent=1 // pred_check
      _
    $region19: #{ts_lstm_net_forward.1} parent=1 // pred_check_branch
      %46 = sbr.rel (0) target = $region21
    $region20: #{ts_lstm_net_forward.1} parent=1 // pred_region
      _
    $region21: #{ts_lstm_net_forward.1} parent=1 // pred_fallthru
      _
    // Predicated region
    $region22: #{ts_lstm_net_forward.1} parent=1 // pred_check
      _
    $region23: #{ts_lstm_net_forward.1} parent=1 // pred_check_branch
      %48 = sbr.rel (0) target = $region25
    $region24: #{ts_lstm_net_forward.1} parent=1 // pred_region
      _
    $region25: #{ts_lstm_net_forward.1} parent=1 // pred_fallthru
      _
    // Predicated region
    $region26: #{ts_lstm_net_forward.1} parent=1 // pred_check
      _
    $region27: #{ts_lstm_net_forward.1} parent=1 // pred_check_branch
      %50 = sbr.rel (0) target = $region29
    $region28: #{ts_lstm_net_forward.1} parent=1 // pred_region
      %52 = dma.done [#allocation5], 256
    $region29: #{ts_lstm_net_forward.1} parent=1 // pred_fallthru
      _
    // Predicated region
    $region30: #{ts_lstm_net_forward.1} parent=1 // pred_check
      _
    $region31: #{ts_lstm_net_forward.1} parent=1 // pred_check_branch
      %54 = sbr.rel (0) target = $region33
    $region32: #{ts_lstm_net_forward.1} parent=1 // pred_region
      %56 = dma.done [#allocation7], 256
    $region33: #{ts_lstm_net_forward.1} parent=1 // pred_fallthru
      _
    %v57 = vld [vmem:[#allocation4] sm:$0xff]
    %v58 = vld [vmem:[#allocation4 + $0x8] sm:$0xff]
    %v59 = vld [vmem:[#allocation6] sm:$0xff]
    %v60 = vld [vmem:[#allocation6 + $0x8] sm:$0xff]
    %v61 = vld [vmem:[%s2] sm:$0x1]
    %v63 = vperm.slane %v61, 0
    %vm65 = vcmask 130048
    %v67 = vsel %vm65, %v57, 0
    %v70 = vsel %vm65, %v58, 0
    %72 = vmatpush.msra.mxu0 0.0
    %73 = vmatpush.msra.mxu0 0.0
    %74 = vmatpush.msra.mxu0 0.0
    %75 = vmatpush.msra.mxu0 0.0
    %76 = vmatpush.msra.mxu0 0.0
    %77 = vmatpush.msra.mxu0 0.0
    %78 = vmatpush.msra.mxu0 0.0
    %79 = vmatpush.msra.mxu0 0.0
    %80 = vmatpush.msra.mxu0 0.0
    %81 = vmatpush.msra.mxu0 0.0
    %82 = vmatpush.msra.mxu0 0.0
    %83 = vmatpush.msra.mxu0 0.0
    %84 = vmatpush.msra.mxu0 0.0
    %85 = vmatpush.msra.mxu0 0.0
    %86 = vmatpush.msra.mxu0 %v60
    %87 = vmatpush.msra.mxu0 %v59
    %88 = vmatmul.f32.gmra.mxu0 %v67
    %v89 = vpop.f32.mrf.mxu0
    %v90 = vadd.f32 %v63, %v89
    %91 = vmatmul.f32.gmra.mxu0 %v70
    %v92 = vpop.f32.mrf.mxu0
    %v93 = vadd.f32 %v63, %v92
    %94 = vdwg.mxu0
    %v95 = vld [vmem:[%s3] sm:$0xff]
    %v96 = vld [vmem:[%s3 + $0x8] sm:$0xff]
    %v97 = vld [vmem:[%s3 + $0x10] sm:$0xff]
    %v98 = vld [vmem:[%s3 + $0x18] sm:$0xff]
    %v99 = vlaneseq
    %v100 = vand.u32 %v99, 127
    %vm101 = vcmp.ge.s32.totalorder %v100, 64
    %vm102 = vcmp.lt.s32.totalorder %v100, 96
    %vm103 = vmand %vm101, %vm102
    %v104 = vsel %vm103, 1.0, 0.5
    %v105 = vsel %vm103, 0.0, 0.5
    %vm106 = vcmask 261120
    %v108 = vsel %vm106, 0.0, 0
    %110 = vmatpush.msra.mxu0 0.0
    %111 = vmatpush.msra.mxu0 0.0
    %112 = vmatpush.msra.mxu0 0.0
    %113 = vmatpush.msra.mxu0 0.0
    %114 = vmatpush.msra.mxu0 0.0
    %115 = vmatpush.msra.mxu0 0.0
    %116 = vmatpush.msra.mxu0 0.0
    %117 = vmatpush.msra.mxu0 0.0
    %118 = vmatpush.msra.mxu0 0.0
    %119 = vmatpush.msra.mxu0 0.0
    %120 = vmatpush.msra.mxu0 0.0
    %121 = vmatpush.msra.mxu0 0.0
    %122 = vmatpush.msra.mxu0 %v98
    %123 = vmatpush.msra.mxu0 %v97
    %124 = vmatpush.msra.mxu0 %v96
    %125 = vmatpush.msra.mxu0 %v95
    %126 = vmatmul.f32.gmra.mxu0 %v108
    %v127 = vpop.f32.mrf.mxu0
    %v128 = vadd.f32 0.0, %v127
    %129 = vdwg.mxu0
    %v130 = vadd.f32 %v90, %v128
    %v131 = vmul.f32 %v130, %v104
    %v132 = vtanh.pop %v131
    %v133 = vmul.f32 %v132, %v104
    %v134 = vadd.f32 %v133, %v105
    %v135 = vmul.f32 %v134, 0.0
    %137 = vrot.lane.b32.xlu0 %v134, 64
    %v138 = vpop.permute.xlu0 %137
    %v140 = vmul.f32 %v134, %v138
    %142 = vrot.lane.b32.xlu0 %v140, 32
    %v143 = vpop.permute.xlu0 %142
    %v145 = vadd.f32 %v135, %v143
    %v146 = vtanh.pop %v145
    %148 = vrot.lane.b32.xlu0 %v146, 64
    %v149 = vpop.permute.xlu0 %148
    %v151 = vmul.f32 %v134, %v149
    %153 = vrot.lane.b32.xlu0 %v151, 32
    %v154 = vpop.permute.xlu0 %153
    %vm156 = vcmask 254976
    %157 = vst.msk [vmem:[#allocation2] sm:$0x3] %vm156, %v154
    %v158 = vsel %vm106, %v154, 0
    %160 = vmatpush.msra.mxu0 0.0
    %161 = vmatpush.msra.mxu0 0.0
    %162 = vmatpush.msra.mxu0 0.0
    %163 = vmatpush.msra.mxu0 0.0
    %164 = vmatpush.msra.mxu0 0.0
    %165 = vmatpush.msra.mxu0 0.0
    %166 = vmatpush.msra.mxu0 0.0
    %167 = vmatpush.msra.mxu0 0.0
    %168 = vmatpush.msra.mxu0 0.0
    %169 = vmatpush.msra.mxu0 0.0
    %170 = vmatpush.msra.mxu0 0.0
    %171 = vmatpush.msra.mxu0 0.0
    %172 = vmatpush.msra.mxu0 %v98
    %173 = vmatpush.msra.mxu0 %v97
    %174 = vmatpush.msra.mxu0 %v96
    %175 = vmatpush.msra.mxu0 %v95
    %176 = vmatmul.f32.gmra.mxu0 %v158
    %v177 = vpop.f32.mrf.mxu0
    %v178 = vadd.f32 0.0, %v177
    %179 = vdwg.mxu0
    %v181 = vrot.slane %v178, 6
    %v183 = vadd.f32 %v90, %v181
    %v184 = vmul.f32 %v183, %v104
    %v185 = vtanh.pop %v184
    %v186 = vmul.f32 %v185, %v104
    %v187 = vadd.f32 %v186, %v105
    %v189 = vrot.slane %v145, 6
    %v191 = vmul.f32 %v187, %v189
    %193 = vrot.lane.b32.xlu0 %v187, 64
    %v194 = vpop.permute.xlu0 %193
    %v196 = vmul.f32 %v187, %v194
    %198 = vrot.lane.b32.xlu0 %v196, 32
    %v199 = vpop.permute.xlu0 %198
    %v201 = vadd.f32 %v191, %v199
    %v202 = vtanh.pop %v201
    %204 = vrot.lane.b32.xlu0 %v202, 64
    %v205 = vpop.permute.xlu0 %204
    %v207 = vmul.f32 %v187, %v205
    %209 = vrot.lane.b32.xlu0 %v207, 32
    %v210 = vpop.permute.xlu0 %209
    %vm212 = vcmask 257026
    %213 = vst.msk [vmem:[#allocation2] sm:$0xc] %vm212, %v210
    %v214 = vrot.slane %v207, 2
    %215 = vrot.lane.b32.xlu0 %v214, 32
    %v216 = vpop.permute.xlu0 %215
    %v217 = vsel %vm106, %v216, 0
    %219 = vmatpush.msra.mxu0 0.0
    %220 = vmatpush.msra.mxu0 0.0
    %221 = vmatpush.msra.mxu0 0.0
    %222 = vmatpush.msra.mxu0 0.0
    %223 = vmatpush.msra.mxu0 0.0
    %224 = vmatpush.msra.mxu0 0.0
    %225 = vmatpush.msra.mxu0 0.0
    %226 = vmatpush.msra.mxu0 0.0
    %227 = vmatpush.msra.mxu0 0.0
    %228 = vmatpush.msra.mxu0 0.0
    %229 = vmatpush.msra.mxu0 0.0
    %230 = vmatpush.msra.mxu0 0.0
    %231 = vmatpush.msra.mxu0 %v98
    %232 = vmatpush.msra.mxu0 %v97
    %233 = vmatpush.msra.mxu0 %v96
    %234 = vmatpush.msra.mxu0 %v95
    %235 = vmatmul.f32.gmra.mxu0 %v217
    %v236 = vpop.f32.mrf.mxu0
    %v237 = vadd.f32 0.0, %v236
    %238 = vdwg.mxu0
    %v240 = vrot.slane %v237, 4
    %v242 = vadd.f32 %v90, %v240
    %v243 = vmul.f32 %v242, %v104
    %v244 = vtanh.pop %v243
    %v245 = vmul.f32 %v244, %v104
    %v246 = vadd.f32 %v245, %v105
    %v248 = vrot.slane %v201, 6
    %v250 = vmul.f32 %v246, %v248
    %252 = vrot.lane.b32.xlu0 %v246, 64
    %v253 = vpop.permute.xlu0 %252
    %v255 = vmul.f32 %v246, %v253
    %257 = vrot.lane.b32.xlu0 %v255, 32
    %v258 = vpop.permute.xlu0 %257
    %v260 = vadd.f32 %v250, %v258
    %v261 = vtanh.pop %v260
    %263 = vrot.lane.b32.xlu0 %v261, 64
    %v264 = vpop.permute.xlu0 %263
    %v266 = vmul.f32 %v246, %v264
    %268 = vrot.lane.b32.xlu0 %v266, 32
    %v269 = vpop.permute.xlu0 %268
    %vm271 = vcmask 259076
    %272 = vst.msk [vmem:[#allocation2] sm:$0x30] %vm271, %v269
    %v273 = vrot.slane %v266, 4
    %274 = vrot.lane.b32.xlu0 %v273, 32
    %v275 = vpop.permute.xlu0 %274
    %v276 = vsel %vm106, %v275, 0
    %278 = vmatpush.msra.mxu0 0.0
    %279 = vmatpush.msra.mxu0 0.0
    %280 = vmatpush.msra.mxu0 0.0
    %281 = vmatpush.msra.mxu0 0.0
    %282 = vmatpush.msra.mxu0 0.0
    %283 = vmatpush.msra.mxu0 0.0
    %284 = vmatpush.msra.mxu0 0.0
    %285 = vmatpush.msra.mxu0 0.0
    %286 = vmatpush.msra.mxu0 0.0
    %287 = vmatpush.msra.mxu0 0.0
    %288 = vmatpush.msra.mxu0 0.0
    %289 = vmatpush.msra.mxu0 0.0
    %290 = vmatpush.msra.mxu0 %v98
    %291 = vmatpush.msra.mxu0 %v97
    %292 = vmatpush.msra.mxu0 %v96
    %293 = vmatpush.msra.mxu0 %v95
    %294 = vmatmul.f32.gmra.mxu0 %v276
    %v295 = vpop.f32.mrf.mxu0
    %v296 = vadd.f32 0.0, %v295
    %297 = vdwg.mxu0
    %v299 = vrot.slane %v296, 2
    %v301 = vadd.f32 %v90, %v299
    %v302 = vmul.f32 %v301, %v104
    %v303 = vtanh.pop %v302
    %v304 = vmul.f32 %v303, %v104
    %v305 = vadd.f32 %v304, %v105
    %v307 = vrot.slane %v260, 6
    %v309 = vmul.f32 %v305, %v307
    %311 = vrot.lane.b32.xlu0 %v305, 64
    %v312 = vpop.permute.xlu0 %311
    %v314 = vmul.f32 %v305, %v312
    %316 = vrot.lane.b32.xlu0 %v314, 32
    %v317 = vpop.permute.xlu0 %316
    %v319 = vadd.f32 %v309, %v317
    %v320 = vtanh.pop %v319
    %322 = vrot.lane.b32.xlu0 %v320, 64
    %v323 = vpop.permute.xlu0 %322
    %v325 = vmul.f32 %v305, %v323
    %327 = vrot.lane.b32.xlu0 %v325, 32
    %v328 = vpop.permute.xlu0 %327
    %vm330 = vcmask 261126
    %331 = vst.msk [vmem:[#allocation2] sm:$0xc0] %vm330, %v328
    %v332 = vrot.slane %v325, 6
    %333 = vrot.lane.b32.xlu0 %v332, 32
    %v334 = vpop.permute.xlu0 %333
    %v335 = vsel %vm106, %v334, 0
    %337 = vmatpush.msra.mxu0 0.0
    %338 = vmatpush.msra.mxu0 0.0
    %339 = vmatpush.msra.mxu0 0.0
    %340 = vmatpush.msra.mxu0 0.0
    %341 = vmatpush.msra.mxu0 0.0
    %342 = vmatpush.msra.mxu0 0.0
    %343 = vmatpush.msra.mxu0 0.0
    %344 = vmatpush.msra.mxu0 0.0
    %345 = vmatpush.msra.mxu0 0.0
    %346 = vmatpush.msra.mxu0 0.0
    %347 = vmatpush.msra.mxu0 0.0
    %348 = vmatpush.msra.mxu0 0.0
    %349 = vmatpush.msra.mxu0 %v98
    %350 = vmatpush.msra.mxu0 %v97
    %351 = vmatpush.msra.mxu0 %v96
    %352 = vmatpush.msra.mxu0 %v95
    %353 = vmatmul.f32.gmra.mxu0 %v335
    %v354 = vpop.f32.mrf.mxu0
    %v355 = vadd.f32 0.0, %v354
    %356 = vdwg.mxu0
    %v357 = vadd.f32 %v93, %v355
    %v358 = vmul.f32 %v357, %v104
    %v359 = vtanh.pop %v358
    %v360 = vmul.f32 %v359, %v104
    %v361 = vadd.f32 %v360, %v105
    %v363 = vrot.slane %v319, 6
    %v365 = vmul.f32 %v361, %v363
    %367 = vrot.lane.b32.xlu0 %v361, 64
    %v368 = vpop.permute.xlu0 %367
    %v370 = vmul.f32 %v361, %v368
    %372 = vrot.lane.b32.xlu0 %v370, 32
    %v373 = vpop.permute.xlu0 %372
    %v375 = vadd.f32 %v365, %v373
    %v376 = vtanh.pop %v375
    %378 = vrot.lane.b32.xlu0 %v376, 64
    %v379 = vpop.permute.xlu0 %378
    %v381 = vmul.f32 %v361, %v379
    %383 = vrot.lane.b32.xlu0 %v381, 32
    %v384 = vpop.permute.xlu0 %383
    %386 = vst.msk [vmem:[#allocation2 + $0x8] sm:$0x3] %vm156, %v384
    %v387 = vsel %vm106, %v384, 0
    %389 = vmatpush.msra.mxu0 0.0
    %390 = vmatpush.msra.mxu0 0.0
    %391 = vmatpush.msra.mxu0 0.0
    %392 = vmatpush.msra.mxu0 0.0
    %393 = vmatpush.msra.mxu0 0.0
    %394 = vmatpush.msra.mxu0 0.0
    %395 = vmatpush.msra.mxu0 0.0
    %396 = vmatpush.msra.mxu0 0.0
    %397 = vmatpush.msra.mxu0 0.0
    %398 = vmatpush.msra.mxu0 0.0
    %399 = vmatpush.msra.mxu0 0.0
    %400 = vmatpush.msra.mxu0 0.0
    %401 = vmatpush.msra.mxu0 %v98
    %402 = vmatpush.msra.mxu0 %v97
    %403 = vmatpush.msra.mxu0 %v96
    %404 = vmatpush.msra.mxu0 %v95
    %405 = vmatmul.f32.gmra.mxu0 %v387
    %v406 = vpop.f32.mrf.mxu0
    %v407 = vadd.f32 0.0, %v406
    %408 = vdwg.mxu0
    %v410 = vrot.slane %v407, 6
    %v412 = vadd.f32 %v93, %v410
    %v413 = vmul.f32 %v412, %v104
    %v414 = vtanh.pop %v413
    %v415 = vmul.f32 %v414, %v104
    %v416 = vadd.f32 %v415, %v105
    %v418 = vrot.slane %v375, 6
    %v420 = vmul.f32 %v416, %v418
    %422 = vrot.lane.b32.xlu0 %v416, 64
    %v423 = vpop.permute.xlu0 %422
    %v425 = vmul.f32 %v416, %v423
    %427 = vrot.lane.b32.xlu0 %v425, 32
    %v428 = vpop.permute.xlu0 %427
    %v430 = vadd.f32 %v420, %v428
    %v431 = vtanh.pop %v430
    %433 = vrot.lane.b32.xlu0 %v431, 64
    %v434 = vpop.permute.xlu0 %433
    %v436 = vmul.f32 %v416, %v434
    %438 = vrot.lane.b32.xlu0 %v436, 32
    %v439 = vpop.permute.xlu0 %438
    %441 = vst.msk [vmem:[#allocation2 + $0x8] sm:$0xc] %vm212, %v439
    %v442 = vrot.slane %v436, 2
    %443 = vrot.lane.b32.xlu0 %v442, 32
    %v444 = vpop.permute.xlu0 %443
    %v445 = vsel %vm106, %v444, 0
    %447 = vmatpush.msra.mxu0 0.0
    %448 = vmatpush.msra.mxu0 0.0
    %449 = vmatpush.msra.mxu0 0.0
    %450 = vmatpush.msra.mxu0 0.0
    %451 = vmatpush.msra.mxu0 0.0
    %452 = vmatpush.msra.mxu0 0.0
    %453 = vmatpush.msra.mxu0 0.0
    %454 = vmatpush.msra.mxu0 0.0
    %455 = vmatpush.msra.mxu0 0.0
    %456 = vmatpush.msra.mxu0 0.0
    %457 = vmatpush.msra.mxu0 0.0
    %458 = vmatpush.msra.mxu0 0.0
    %459 = vmatpush.msra.mxu0 %v98
    %460 = vmatpush.msra.mxu0 %v97
    %461 = vmatpush.msra.mxu0 %v96
    %462 = vmatpush.msra.mxu0 %v95
    %463 = vmatmul.f32.gmra.mxu0 %v445
    %v464 = vpop.f32.mrf.mxu0
    %v465 = vadd.f32 0.0, %v464
    %466 = vdwg.mxu0
    %v468 = vrot.slane %v465, 4
    %v470 = vadd.f32 %v93, %v468
    %v471 = vmul.f32 %v470, %v104
    %v472 = vtanh.pop %v471
    %v473 = vmul.f32 %v472, %v104
    %v474 = vadd.f32 %v473, %v105
    %v476 = vrot.slane %v430, 6
    %v478 = vmul.f32 %v474, %v476
    %480 = vrot.lane.b32.xlu0 %v474, 64
    %v481 = vpop.permute.xlu0 %480
    %v483 = vmul.f32 %v474, %v481
    %485 = vrot.lane.b32.xlu0 %v483, 32
    %v486 = vpop.permute.xlu0 %485
    %v488 = vadd.f32 %v478, %v486
    %v489 = vtanh.pop %v488
    %491 = vrot.lane.b32.xlu0 %v489, 64
    %v492 = vpop.permute.xlu0 %491
    %v494 = vmul.f32 %v474, %v492
    %496 = vrot.lane.b32.xlu0 %v494, 32
    %v497 = vpop.permute.xlu0 %496
    %499 = vst.msk [vmem:[#allocation2 + $0x8] sm:$0x30] %vm271, %v497
    %v500 = vrot.slane %v494, 4
    %501 = vrot.lane.b32.xlu0 %v500, 32
    %v502 = vpop.permute.xlu0 %501
    %v503 = vsel %vm106, %v502, 0
    %505 = vmatpush.msra.mxu0 0.0
    %506 = vmatpush.msra.mxu0 0.0
    %507 = vmatpush.msra.mxu0 0.0
    %508 = vmatpush.msra.mxu0 0.0
    %509 = vmatpush.msra.mxu0 0.0
    %510 = vmatpush.msra.mxu0 0.0
    %511 = vmatpush.msra.mxu0 0.0
    %512 = vmatpush.msra.mxu0 0.0
    %513 = vmatpush.msra.mxu0 0.0
    %514 = vmatpush.msra.mxu0 0.0
    %515 = vmatpush.msra.mxu0 0.0
    %516 = vmatpush.msra.mxu0 0.0
    %517 = vmatpush.msra.mxu0 %v98
    %518 = vmatpush.msra.mxu0 %v97
    %519 = vmatpush.msra.mxu0 %v96
    %520 = vmatpush.msra.mxu0 %v95
    %521 = vmatmul.f32.gmra.mxu0 %v503
    %v522 = vpop.f32.mrf.mxu0
    %v523 = vadd.f32 0.0, %v522
    %524 = vdwg.mxu0
    %v526 = vrot.slane %v523, 2
    %v528 = vadd.f32 %v93, %v526
    %v529 = vmul.f32 %v528, %v104
    %v530 = vtanh.pop %v529
    %v531 = vmul.f32 %v530, %v104
    %v532 = vadd.f32 %v531, %v105
    %v534 = vrot.slane %v488, 6
    %v536 = vmul.f32 %v532, %v534
    %538 = vrot.lane.b32.xlu0 %v532, 64
    %v539 = vpop.permute.xlu0 %538
    %v541 = vmul.f32 %v532, %v539
    %543 = vrot.lane.b32.xlu0 %v541, 32
    %v544 = vpop.permute.xlu0 %543
    %v546 = vadd.f32 %v536, %v544
    %v547 = vtanh.pop %v546
    %549 = vrot.lane.b32.xlu0 %v547, 64
    %v550 = vpop.permute.xlu0 %549
    %v552 = vmul.f32 %v532, %v550
    %554 = vrot.lane.b32.xlu0 %v552, 32
    %v555 = vpop.permute.xlu0 %554
    %557 = vst.msk [vmem:[#allocation2 + $0x8] sm:$0xc0] %vm330, %v555
    %v558 = vld [vmem:[#allocation2] sm:$0xff]
    %v559 = vld [vmem:[#allocation2 + $0x8] sm:$0xff]
    %v560 = vld [vmem:[%s4] sm:$0xff]
    %v561 = vld [vmem:[%s4 + $0x8] sm:$0xff]
    %v562 = vld [vmem:[%s4 + $0x10] sm:$0xff]
    %v563 = vld [vmem:[%s4 + $0x18] sm:$0xff]
    %v564 = vld [vmem:[#allocation3] sm:$0x1]
    %v566 = vperm.slane %v564, 0
    %v569 = vsel %vm106, %v558, 0
    %v572 = vsel %vm106, %v559, 0
    %574 = vmatpush.msra.mxu0 0.0
    %575 = vmatpush.msra.mxu0 0.0
    %576 = vmatpush.msra.mxu0 0.0
    %577 = vmatpush.msra.mxu0 0.0
    %578 = vmatpush.msra.mxu0 0.0
    %579 = vmatpush.msra.mxu0 0.0
    %580 = vmatpush.msra.mxu0 0.0
    %581 = vmatpush.msra.mxu0 0.0
    %582 = vmatpush.msra.mxu0 0.0
    %583 = vmatpush.msra.mxu0 0.0
    %584 = vmatpush.msra.mxu0 0.0
    %585 = vmatpush.msra.mxu0 0.0
    %586 = vmatpush.msra.mxu0 %v563
    %587 = vmatpush.msra.mxu0 %v562
    %588 = vmatpush.msra.mxu0 %v561
    %589 = vmatpush.msra.mxu0 %v560
    %590 = vmatmul.f32.gmra.mxu0 %v569
    %v591 = vpop.f32.mrf.mxu0
    %v592 = vadd.f32 %v566, %v591
    %593 = vmatmul.f32.gmra.mxu0 %v572
    %v594 = vpop.f32.mrf.mxu0
    %v595 = vadd.f32 %v566, %v594
    %596 = vdwg.mxu0
    %vm597 = vcmask 7168
    %598 = vst.msk [vmem:[%s6] sm:$0xff] %vm597, %v592
    %599 = vst.msk [vmem:[%s6 + $0x8] sm:$0xff] %vm597, %v595
    // Predicated region
    $region34: #{ts_lstm_net_forward.1} parent=1 // pred_check
      _
    $region35: #{ts_lstm_net_forward.1} parent=1 // pred_check_branch
      %601 = sbr.rel (0) target = $region37
    $region36: #{ts_lstm_net_forward.1} parent=1 // pred_region
      _
    $region37: #{ts_lstm_net_forward.1} parent=1 // pred_fallthru
      _
    // Predicated region
    $region38: #{ts_lstm_net_forward.1} parent=1 // pred_check
      _
    $region39: #{ts_lstm_net_forward.1} parent=1 // pred_check_branch
      %603 = sbr.rel (0) target = $region41
    $region40: #{ts_lstm_net_forward.1} parent=1 // pred_region
      _
    $region41: #{ts_lstm_net_forward.1} parent=1 // pred_fallthru
      _
    %604 = vsyncpa [#allocation5], 1
    %605 = vsyncpa [#allocation7], 1

</llo_original>
